<compile_context>
chip_gen: v6e
topology: v6e:2x2x1
jax: 0.10.0
libtpu: 0.0.40
codegen_flags: <defaults>
</compile_context>

<pallas_src>
import functools

import jax
import jax.numpy as jnp
from jax.experimental import pallas as pl
from jax.experimental.pallas import tpu as pltpu


def _round_up(x, m):
    return (x + m - 1) // m * m


# ---------------------------------------------------------------------------
# Host-side parameter packing (done once, outside the hot path)
# ---------------------------------------------------------------------------
def pack_params(params, n_observations, n_actions, h_dim):
    """Pack all 12 parameters into one zero-padded [R, 2*h_dim] f32 slab.

    Every block starts on a row offset that is a multiple of 8 so in-kernel
    static row slices stay sublane-aligned.  Narrow blocks are zero-padded to
    width W = 2*h_dim so every matmul in the kernel is a uniform full-width
    dot (zero padding contributes nothing).
    """
    (w1, b1, w2, b2, wv1, bv1, wv2, bv2, wa1, ba1, wa2, ba2) = params
    W = 2 * h_dim
    A = n_actions
    assert A + 1 <= W, "packed width too small for fused output layer"

    def pad_to(a, rows, cols):
        a = a.astype(jnp.float32)
        return jnp.pad(a, ((0, rows - a.shape[0]), (0, cols - a.shape[1])))

    # Fused value/advantage hidden layer: one dot for both streams.
    w3 = jnp.concatenate([wv1, wa1], axis=1)                     # [h, 2h]
    b3 = jnp.concatenate([bv1, ba1], axis=1)                     # [1, 2h]

    # Fused output layer:
    #   cols 0..A-1 : q_raw[b, j] = v_b + a_{b, j}   (wv2 replicated per column)
    #   col  A      : sum_j a[b, j]                  (row-sum of wa2, via MXU)
    w4 = jnp.zeros((W, W), jnp.float32)
    w4 = w4.at[:h_dim, :A].set(jnp.tile(wv2.astype(jnp.float32), (1, A)))
    w4 = w4.at[h_dim:2 * h_dim, :A].set(wa2.astype(jnp.float32))
    w4 = w4.at[h_dim:2 * h_dim, A].set(jnp.sum(wa2, axis=1).astype(jnp.float32))
    b4 = jnp.zeros((1, W), jnp.float32)
    b4 = b4.at[0, :A].set((bv2[0, 0] + ba2[0, :]).astype(jnp.float32))
    b4 = b4.at[0, A].set(jnp.sum(ba2).astype(jnp.float32))

    blocks = [
        ("w1", pad_to(w1, n_observations, W)),
        ("b1", pad_to(b1, 1, W)),
        ("w2", pad_to(w2, W, W)),
        ("b2", pad_to(b2, 1, W)),
        ("w3", pad_to(w3, W, W)),
        ("b3", pad_to(b3, 1, W)),
        ("w4", w4),
        ("b4", b4),
    ]

    layout = {}
    placed = []
    row = 0
    for name, blk in blocks:
        layout[name] = row
        placed.append((row, blk))
        row = _round_up(row + blk.shape[0], 8)
    total_rows = _round_up(row, 8)

    packed = jnp.zeros((total_rows, W), jnp.float32)
    for start, blk in placed:
        packed = packed.at[start:start + blk.shape[0], :].set(blk)
    return packed, layout


# ---------------------------------------------------------------------------
# Kernel: 4 MXU dots + 3 ReLUs per batch tile, no XLU work on the tail.
# ---------------------------------------------------------------------------
def dueling_dqn_kernel(x_ref, p_ref, va_ref, *, layout, n_observations, h_dim):
    W = 2 * h_dim
    o = layout

    x = x_ref[...]                                               # [tb, n_obs]

    # feature_layer: Linear -> ReLU -> Linear -> ReLU (width padded to W)
    w1 = p_ref[o["w1"]:o["w1"] + n_observations, :]
    b1 = p_ref[o["b1"]:o["b1"] + 1, :]
    h = jnp.maximum(
        jnp.dot(x, w1, preferred_element_type=jnp.float32) + b1, 0.0)

    w2 = p_ref[o["w2"]:o["w2"] + W, :]
    b2 = p_ref[o["b2"]:o["b2"] + 1, :]
    h = jnp.maximum(
        jnp.dot(h, w2, preferred_element_type=jnp.float32) + b2, 0.0)

    # fused value + advantage hidden layer: one dot for both streams
    w3 = p_ref[o["w3"]:o["w3"] + W, :]
    b3 = p_ref[o["b3"]:o["b3"] + 1, :]
    h = jnp.maximum(
        jnp.dot(h, w3, preferred_element_type=jnp.float32) + b3, 0.0)

    # fused output layer:
    #   col j < A : q_raw[b, j] = v_b + a_{b, j}
    #   col A     : sum_j a[b, j]   (per-row advantage sum, produced on the MXU)
    w4 = p_ref[o["w4"]:o["w4"] + W, :]
    b4 = p_ref[o["b4"]:o["b4"] + 1, :]
    va_ref[...] = jnp.dot(h, w4, preferred_element_type=jnp.float32) + b4


# ---------------------------------------------------------------------------
# Wrapper: batch-tiled grid, params kept VMEM-resident, tiny XLA epilogue for
# the GLOBAL advantages.mean() (matches the PyTorch module's .mean()).
# ---------------------------------------------------------------------------
def dueling_dqn_forward(state, packed_params, layout, *,
                        n_observations, n_actions, h_dim, block_b=512):
    B = state.shape[0]
    W = 2 * h_dim
    R = packed_params.shape[0]

    tile_b = min(block_b, _round_up(B, 8))
    B_pad = _round_up(B, tile_b)
    if B_pad != B:
        state = jnp.pad(state, ((0, B_pad - B), (0, 0)))

    kernel = functools.partial(
        dueling_dqn_kernel,
        layout=layout, n_observations=n_observations, h_dim=h_dim)

    va = pl.pallas_call(
        kernel,
        out_shape=jax.ShapeDtypeStruct((B_pad, W), jnp.float32),
        grid=(B_pad // tile_b,),
        in_specs=[
            # state: tiled over the batch grid
            pl.BlockSpec((tile_b, n_observations), lambda i: (i, 0)),
            # packed params: constant index_map -> fetched once, VMEM-resident
            pl.BlockSpec((R, W), lambda i: (0, 0)),
        ],
        out_specs=pl.BlockSpec((tile_b, W), lambda i: (i, 0)),
        compiler_params=pltpu.CompilerParams(
            dimension_semantics=("parallel",)),   # megacore batch split on v7x
    )(state, packed_params)

    # Cheap XLA epilogue (decouples batch tiles so the grid axis can be parallel):
    # q = q_raw - mean(advantages)  with the GLOBAL mean over batch AND actions,
    # exactly as `advantages.mean()` in the PyTorch module.  Padded rows are
    # excluded by slicing [:B]; the reciprocal denominator folds at trace time.
    q_raw = va[:B, :n_actions]                        # v + a, lane offset 0
    a_mean = jnp.sum(va[:B, n_actions]) * (1.0 / float(B * n_actions))
    return q_raw - a_mean


# ---------------------------------------------------------------------------
# Init + pure-JAX reference
# ---------------------------------------------------------------------------
def init_params(key, n_observations, n_actions, h_dim):
    """Mimics PyTorch nn.Linear default init: U(-1/sqrt(fan_in), +1/sqrt(fan_in))."""
    def linear(key, fan_in, fan_out):
        kw, kb = jax.random.split(key)
        bound = 1.0 / jnp.sqrt(float(fan_in))
        w = jax.random.uniform(kw, (fan_in, fan_out), jnp.float32, -bound, bound)
        b = jax.random.uniform(kb, (1, fan_out), jnp.float32, -bound, bound)
        return w, b

    keys = jax.random.split(key, 6)
    w1, b1 = linear(keys[0], n_observations, h_dim)
    w2, b2 = linear(keys[1], h_dim, h_dim)
    wv1, bv1 = linear(keys[2], h_dim, h_dim)
    wv2, bv2 = linear(keys[3], h_dim, 1)
    wa1, ba1 = linear(keys[4], h_dim, h_dim)
    wa2, ba2 = linear(keys[5], h_dim, n_actions)
    return (w1, b1, w2, b2, wv1, bv1, wv2, bv2, wa1, ba1, wa2, ba2)


def reference_forward(state, params):
    """Mirrors the PyTorch module exactly (unfused, unpacked)."""
    (w1, b1, w2, b2, wv1, bv1, wv2, bv2, wa1, ba1, wa2, ba2) = params
    h = jnp.maximum(state @ w1 + b1, 0.0)
    h = jnp.maximum(h @ w2 + b2, 0.0)
    v = jnp.maximum(h @ wv1 + bv1, 0.0) @ wv2 + bv2
    a = jnp.maximum(h @ wa1 + ba1, 0.0) @ wa2 + ba2
    return v + (a - jnp.mean(a))


if __name__ == "__main__":
    B = 8
    n_observations = 16
    n_actions = 4
    h_dim = 32

    key = jax.random.PRNGKey(0)
    k_state, k_params = jax.random.split(key)

    state = jax.random.normal(k_state, (B, n_observations), dtype=jnp.float32)
    params = init_params(k_params, n_observations, n_actions, h_dim)

    # One-time host-side packing (outside the hot path).
    packed, layout = pack_params(params, n_observations, n_actions, h_dim)
    packed = jax.block_until_ready(packed)

    qvals = dueling_dqn_forward(state, packed, layout,
                                n_observations=n_observations,
                                n_actions=n_actions, h_dim=h_dim)
    qvals = jax.block_until_ready(qvals)

    ref = reference_forward(state, params)
    assert qvals.shape == (B, n_actions)
    assert jnp.allclose(qvals, ref, atol=1e-5, rtol=1e-5), "mismatch vs reference"

    print("KERNEL_OK")
</pallas_src>

<mosaic_0001>
module attributes {stable_mosaic.version = 11 : i64} {
  func.func @dueling_dqn_kernel(%arg0: i32, %arg1: memref<8x16xf32, #tpu.memory_space<vmem>>, %arg2: memref<240x64xf32, #tpu.memory_space<vmem>>, %arg3: memref<8x64xf32, #tpu.memory_space<vmem>>) attributes {dimension_semantics = [#tpu.dimension_semantics<parallel>], iteration_bounds = array<i64: 1>, scalar_prefetch = 0 : i64, scratch_operands = 0 : i64, tpu.core_type = #tpu.core_type<tc>, window_params = [{transform_indices = @transform_0, window_bounds = array<i64: 8, 16>}, {pipeline_mode = #tpu.pipeline_mode<synchronous>, transform_indices = @transform_1, window_bounds = array<i64: 240, 64>}, {transform_indices = @transform_2, window_bounds = array<i64: 8, 64>}]} {
    %c0 = arith.constant 0 : index
    %c0_0 = arith.constant 0 : index
    %0 = vector.load %arg1[%c0, %c0_0] : memref<8x16xf32, #tpu.memory_space<vmem>>, vector<8x16xf32>
    %c0_1 = arith.constant 0 : index
    %c0_2 = arith.constant 0 : index
    %1 = vector.load %arg2[%c0_1, %c0_2] : memref<240x64xf32, #tpu.memory_space<vmem>>, vector<16x64xf32>
    %c16 = arith.constant 16 : index
    %c0_3 = arith.constant 0 : index
    %2 = vector.load %arg2[%c16, %c0_3] : memref<240x64xf32, #tpu.memory_space<vmem>>, vector<1x64xf32>
    %cst = arith.constant dense<0.000000e+00> : vector<8x64xf32>
    %3 = tpu.matmul %0, %1, %cst {dimension_numbers = #tpu.dot_dimension_numbers<[1], [0], [0], [1], [0, 0, 1, 1], [], []>} : vector<8x16xf32>, vector<16x64xf32>, vector<8x64xf32> -> vector<8x64xf32>
    %4 = vector.broadcast %2 : vector<1x64xf32> to vector<8x64xf32>
    %5 = arith.addf %3, %4 : vector<8x64xf32>
    %cst_4 = arith.constant 0.000000e+00 : f32
    %6 = vector.broadcast %cst_4 : f32 to vector<8x64xf32>
    %7 = arith.maximumf %5, %6 : vector<8x64xf32>
    %c24 = arith.constant 24 : index
    %c0_5 = arith.constant 0 : index
    %8 = vector.load %arg2[%c24, %c0_5] : memref<240x64xf32, #tpu.memory_space<vmem>>, vector<64x64xf32>
    %c88 = arith.constant 88 : index
    %c0_6 = arith.constant 0 : index
    %9 = vector.load %arg2[%c88, %c0_6] : memref<240x64xf32, #tpu.memory_space<vmem>>, vector<1x64xf32>
    %cst_7 = arith.constant dense<0.000000e+00> : vector<8x64xf32>
    %10 = tpu.matmul %7, %8, %cst_7 {dimension_numbers = #tpu.dot_dimension_numbers<[1], [0], [0], [1], [0, 0, 1, 1], [], []>} : vector<8x64xf32>, vector<64x64xf32>, vector<8x64xf32> -> vector<8x64xf32>
    %11 = vector.broadcast %9 : vector<1x64xf32> to vector<8x64xf32>
    %12 = arith.addf %10, %11 : vector<8x64xf32>
    %cst_8 = arith.constant 0.000000e+00 : f32
    %13 = vector.broadcast %cst_8 : f32 to vector<8x64xf32>
    %14 = arith.maximumf %12, %13 : vector<8x64xf32>
    %c96 = arith.constant 96 : index
    %c0_9 = arith.constant 0 : index
    %15 = vector.load %arg2[%c96, %c0_9] : memref<240x64xf32, #tpu.memory_space<vmem>>, vector<64x64xf32>
    %c160 = arith.constant 160 : index
    %c0_10 = arith.constant 0 : index
    %16 = vector.load %arg2[%c160, %c0_10] : memref<240x64xf32, #tpu.memory_space<vmem>>, vector<1x64xf32>
    %cst_11 = arith.constant dense<0.000000e+00> : vector<8x64xf32>
    %17 = tpu.matmul %14, %15, %cst_11 {dimension_numbers = #tpu.dot_dimension_numbers<[1], [0], [0], [1], [0, 0, 1, 1], [], []>} : vector<8x64xf32>, vector<64x64xf32>, vector<8x64xf32> -> vector<8x64xf32>
    %18 = vector.broadcast %16 : vector<1x64xf32> to vector<8x64xf32>
    %19 = arith.addf %17, %18 : vector<8x64xf32>
    %cst_12 = arith.constant 0.000000e+00 : f32
    %20 = vector.broadcast %cst_12 : f32 to vector<8x64xf32>
    %21 = arith.maximumf %19, %20 : vector<8x64xf32>
    %c168 = arith.constant 168 : index
    %c0_13 = arith.constant 0 : index
    %22 = vector.load %arg2[%c168, %c0_13] : memref<240x64xf32, #tpu.memory_space<vmem>>, vector<64x64xf32>
    %c232 = arith.constant 232 : index
    %c0_14 = arith.constant 0 : index
    %23 = vector.load %arg2[%c232, %c0_14] : memref<240x64xf32, #tpu.memory_space<vmem>>, vector<1x64xf32>
    %cst_15 = arith.constant dense<0.000000e+00> : vector<8x64xf32>
    %24 = tpu.matmul %21, %22, %cst_15 {dimension_numbers = #tpu.dot_dimension_numbers<[1], [0], [0], [1], [0, 0, 1, 1], [], []>} : vector<8x64xf32>, vector<64x64xf32>, vector<8x64xf32> -> vector<8x64xf32>
    %25 = vector.broadcast %23 : vector<1x64xf32> to vector<8x64xf32>
    %26 = arith.addf %24, %25 : vector<8x64xf32>
    %c0_16 = arith.constant 0 : index
    %c0_17 = arith.constant 0 : index
    %27 = vector.load %arg3[%c0_16, %c0_17] : memref<8x64xf32, #tpu.memory_space<vmem>>, vector<8x64xf32>
    tpu.vector_store %arg3[%c0_16, %c0_17], %26 {strides = array<i32>} : memref<8x64xf32, #tpu.memory_space<vmem>>, vector<8x64xf32>,
    return
  }
  func.func @transform_0(%arg0: i32) -> (i32, i32) {
    %c0_i32 = arith.constant 0 : i32
    %c0_i32_0 = arith.constant 0 : i32
    return %arg0, %c0_i32 : i32, i32
  }
  func.func @transform_1(%arg0: i32) -> (i32, i32) {
    %c0_i32 = arith.constant 0 : i32
    %c0_i32_0 = arith.constant 0 : i32
    %c0_i32_1 = arith.constant 0 : i32
    return %c0_i32, %c0_i32_0 : i32, i32
  }
  func.func @transform_2(%arg0: i32) -> (i32, i32) {
    %c0_i32 = arith.constant 0 : i32
    %c0_i32_0 = arith.constant 0 : i32
    return %arg0, %c0_i32 : i32, i32
  }
}

</mosaic_0001>

<llo_original>
// kernel: tpu_custom_call.1
$region0: #{tpu_custom_call.1}
  #allocation0 [shape = 'u32[]', space=smem, size = 0x4, offset = 0x4, fixed_abs, tag = 'smem constant byte address 0x4 - core index']
  #allocation1 [shape = 'u32[144,128]{1,0:T(1,128)}', space=vmem, size = 0x12000, scoped, tag = 'internal scratch']
  %s0 = inlined_call_operand.vmem [shape: f32[8,16], index: 0, kind: input, shape index: {}]
  %s1 = inlined_call_operand.vmem [shape: f32[240,64], index: 1, kind: input, shape index: {}]
  %s2 = inlined_call_operand.hbm [shape: f32[8,64], index: 2, kind: output, shape index: {}]
  %s3 = sld [smem:[#allocation0]]
  $region18: #{tpu_custom_call.1} parent=0
    _
  %s5 = ssub.s32 1, %s3
  %s6 = scalar_select 0, %s5, %s3
  $region1: #{tpu_custom_call.1} parent=0
    #allocation2 [shape = 'u8[4096]{0}', space=vmem, size = 0x1000, scoped, tag = 'output window, operand 0, single buffered']
    #allocation3 [shape = 's32[1]{0}', space=sflag, size = 0x4, scoped, tag = 'scoped memory for tpu_custom_call.1']
    %7 = vsyncpa [#allocation3], 0
    // Predicated region
    $region2: #{tpu_custom_call.1} parent=1 // pred_check
      _
    $region3: #{tpu_custom_call.1} parent=1 // pred_check_branch
      %9 = sbr.rel (0) target = $region5
    $region4: #{tpu_custom_call.1} parent=1 // pred_region
      _
    $region5: #{tpu_custom_call.1} parent=1 // pred_fallthru
      _
    // Predicated region
    $region6: #{tpu_custom_call.1} parent=1 // pred_check
      _
    $region7: #{tpu_custom_call.1} parent=1 // pred_check_branch
      %11 = sbr.rel (0) target = $region9
    $region8: #{tpu_custom_call.1} parent=1 // pred_region
      _
    $region9: #{tpu_custom_call.1} parent=1 // pred_fallthru
      _
    %v12 = vld [vmem:[%s0] sm:$0xff]
    %v13 = vld [vmem:[%s1] sm:$0xff]
    %v14 = vld [vmem:[%s1 + $0x8] sm:$0xff]
    %v15 = vld [vmem:[%s1 + $0x10] sm:$0x1]
    %v16 = vlaneseq
    %v17 = vshrl.u32 %v16, 7
    %v18 = vsub.s32 0, %v17
    %v19 = vrot.slane %v15, %v18
    %vm20 = vcmask 130048
    %v22 = vsel %vm20, %v12, 0
    %24 = vmatprep.subr.mxu0 0.0
    %25 = vmatpush1.msra.mxu0 0.0
    %26 = vmatprep.subr.mxu0 0.0
    %27 = vmatpush1.msra.mxu0 0.0
    %28 = vmatprep.subr.mxu0 0.0
    %29 = vmatpush1.msra.mxu0 0.0
    %30 = vmatprep.subr.mxu0 0.0
    %31 = vmatpush1.msra.mxu0 0.0
    %32 = vmatprep.subr.mxu0 0.0
    %33 = vmatpush1.msra.mxu0 0.0
    %34 = vmatprep.subr.mxu0 0.0
    %35 = vmatpush1.msra.mxu0 0.0
    %36 = vmatprep.subr.mxu0 0.0
    %37 = vmatpush1.msra.mxu0 0.0
    %38 = vmatprep.subr.mxu0 0.0
    %39 = vmatpush1.msra.mxu0 0.0
    %40 = vmatprep.subr.mxu0 0.0
    %41 = vmatpush1.msra.mxu0 0.0
    %42 = vmatprep.subr.mxu0 0.0
    %43 = vmatpush1.msra.mxu0 0.0
    %44 = vmatprep.subr.mxu0 0.0
    %45 = vmatpush1.msra.mxu0 0.0
    %46 = vmatprep.subr.mxu0 0.0
    %47 = vmatpush1.msra.mxu0 0.0
    %48 = vmatprep.subr.mxu0 0.0
    %49 = vmatpush1.msra.mxu0 0.0
    %50 = vmatprep.subr.mxu0 0.0
    %51 = vmatpush1.msra.mxu0 0.0
    %52 = vmatprep.subr.mxu0 0.0
    %53 = vmatpush1.msra.mxu0 %v14
    %54 = vmatprep.subr.mxu0 0.0
    %55 = vmatpush1.msra.mxu0 %v13
    %56 = vmatprep.subr.mxu0 0.0
    %57 = vmatpush2.msra.mxu0 0.0
    %58 = vmatprep.subr.mxu0 0.0
    %59 = vmatpush2.msra.mxu0 0.0
    %60 = vmatprep.subr.mxu0 0.0
    %61 = vmatpush2.msra.mxu0 0.0
    %62 = vmatprep.subr.mxu0 0.0
    %63 = vmatpush2.msra.mxu0 0.0
    %64 = vmatprep.subr.mxu0 0.0
    %65 = vmatpush2.msra.mxu0 0.0
    %66 = vmatprep.subr.mxu0 0.0
    %67 = vmatpush2.msra.mxu0 0.0
    %68 = vmatprep.subr.mxu0 0.0
    %69 = vmatpush2.msra.mxu0 0.0
    %70 = vmatprep.subr.mxu0 0.0
    %71 = vmatpush2.msra.mxu0 0.0
    %72 = vmatprep.subr.mxu0 0.0
    %73 = vmatpush2.msra.mxu0 0.0
    %74 = vmatprep.subr.mxu0 0.0
    %75 = vmatpush2.msra.mxu0 0.0
    %76 = vmatprep.subr.mxu0 0.0
    %77 = vmatpush2.msra.mxu0 0.0
    %78 = vmatprep.subr.mxu0 0.0
    %79 = vmatpush2.msra.mxu0 0.0
    %80 = vmatprep.subr.mxu0 0.0
    %81 = vmatpush2.msra.mxu0 0.0
    %82 = vmatprep.subr.mxu0 0.0
    %83 = vmatpush2.msra.mxu0 0.0
    %84 = vmatprep.subr.mxu0 0.0
    %85 = vmatpush2.msra.mxu0 0.0
    %86 = vmatprep.subr.mxu0 0.0
    %87 = vmatpush2.msra.mxu0 0.0
    %88 = vmatprep.mubr.f32.mxu0 0.0
    %89 = vmatmul.mubr.f32.gmra.mxu0 %v22
    %v90 = vpop.f32.mrf.mxu0
    %v91 = vadd.f32 %v19, %v90
    %v92 = vpop.f32.mrf.mxu0
    %93 = vdwg.mxu0
    %v94 = vmax.f32 %v91, 0.0
    %v95 = vld [vmem:[%s1 + $0x18] sm:$0xff]
    %v96 = vld [vmem:[%s1 + $0x20] sm:$0xff]
    %v97 = vld [vmem:[%s1 + $0x28] sm:$0xff]
    %v98 = vld [vmem:[%s1 + $0x30] sm:$0xff]
    %v99 = vld [vmem:[%s1 + $0x38] sm:$0xff]
    %v100 = vld [vmem:[%s1 + $0x40] sm:$0xff]
    %v101 = vld [vmem:[%s1 + $0x48] sm:$0xff]
    %v102 = vld [vmem:[%s1 + $0x50] sm:$0xff]
    %v103 = vld [vmem:[%s1 + $0x58] sm:$0x1]
    %v104 = vlaneseq
    %v105 = vshrl.u32 %v104, 7
    %v106 = vsub.s32 0, %v105
    %v107 = vrot.slane %v103, %v106
    %vm108 = vcmask 523264
    %v110 = vsel %vm108, %v94, 0
    %112 = vmatprep.subr.mxu0 0.0
    %113 = vmatpush1.msra.mxu0 0.0
    %114 = vmatprep.subr.mxu0 0.0
    %115 = vmatpush1.msra.mxu0 0.0
    %116 = vmatprep.subr.mxu0 0.0
    %117 = vmatpush1.msra.mxu0 0.0
    %118 = vmatprep.subr.mxu0 0.0
    %119 = vmatpush1.msra.mxu0 0.0
    %120 = vmatprep.subr.mxu0 0.0
    %121 = vmatpush1.msra.mxu0 0.0
    %122 = vmatprep.subr.mxu0 0.0
    %123 = vmatpush1.msra.mxu0 0.0
    %124 = vmatprep.subr.mxu0 0.0
    %125 = vmatpush1.msra.mxu0 0.0
    %126 = vmatprep.subr.mxu0 0.0
    %127 = vmatpush1.msra.mxu0 0.0
    %128 = vmatprep.subr.mxu0 0.0
    %129 = vmatpush1.msra.mxu0 %v102
    %130 = vmatprep.subr.mxu0 0.0
    %131 = vmatpush1.msra.mxu0 %v101
    %132 = vmatprep.subr.mxu0 0.0
    %133 = vmatpush1.msra.mxu0 %v100
    %134 = vmatprep.subr.mxu0 0.0
    %135 = vmatpush1.msra.mxu0 %v99
    %136 = vmatprep.subr.mxu0 0.0
    %137 = vmatpush1.msra.mxu0 %v98
    %138 = vmatprep.subr.mxu0 0.0
    %139 = vmatpush1.msra.mxu0 %v97
    %140 = vmatprep.subr.mxu0 0.0
    %141 = vmatpush1.msra.mxu0 %v96
    %142 = vmatprep.subr.mxu0 0.0
    %143 = vmatpush1.msra.mxu0 %v95
    %144 = vmatprep.subr.mxu0 0.0
    %145 = vmatpush2.msra.mxu0 0.0
    %146 = vmatprep.subr.mxu0 0.0
    %147 = vmatpush2.msra.mxu0 0.0
    %148 = vmatprep.subr.mxu0 0.0
    %149 = vmatpush2.msra.mxu0 0.0
    %150 = vmatprep.subr.mxu0 0.0
    %151 = vmatpush2.msra.mxu0 0.0
    %152 = vmatprep.subr.mxu0 0.0
    %153 = vmatpush2.msra.mxu0 0.0
    %154 = vmatprep.subr.mxu0 0.0
    %155 = vmatpush2.msra.mxu0 0.0
    %156 = vmatprep.subr.mxu0 0.0
    %157 = vmatpush2.msra.mxu0 0.0
    %158 = vmatprep.subr.mxu0 0.0
    %159 = vmatpush2.msra.mxu0 0.0
    %160 = vmatprep.subr.mxu0 0.0
    %161 = vmatpush2.msra.mxu0 0.0
    %162 = vmatprep.subr.mxu0 0.0
    %163 = vmatpush2.msra.mxu0 0.0
    %164 = vmatprep.subr.mxu0 0.0
    %165 = vmatpush2.msra.mxu0 0.0
    %166 = vmatprep.subr.mxu0 0.0
    %167 = vmatpush2.msra.mxu0 0.0
    %168 = vmatprep.subr.mxu0 0.0
    %169 = vmatpush2.msra.mxu0 0.0
    %170 = vmatprep.subr.mxu0 0.0
    %171 = vmatpush2.msra.mxu0 0.0
    %172 = vmatprep.subr.mxu0 0.0
    %173 = vmatpush2.msra.mxu0 0.0
    %174 = vmatprep.subr.mxu0 0.0
    %175 = vmatpush2.msra.mxu0 0.0
    %176 = vmatprep.mubr.f32.mxu0 0.0
    %177 = vmatmul.mubr.f32.gmra.mxu0 %v110
    %v178 = vpop.f32.mrf.mxu0
    %v179 = vadd.f32 %v107, %v178
    %v180 = vpop.f32.mrf.mxu0
    %181 = vdwg.mxu0
    %v182 = vmax.f32 %v179, 0.0
    %v183 = vld [vmem:[%s1 + $0x60] sm:$0xff]
    %v184 = vld [vmem:[%s1 + $0x68] sm:$0xff]
    %v185 = vld [vmem:[%s1 + $0x70] sm:$0xff]
    %v186 = vld [vmem:[%s1 + $0x78] sm:$0xff]
    %v187 = vld [vmem:[%s1 + $0x80] sm:$0xff]
    %v188 = vld [vmem:[%s1 + $0x88] sm:$0xff]
    %v189 = vld [vmem:[%s1 + $0x90] sm:$0xff]
    %v190 = vld [vmem:[%s1 + $0x98] sm:$0xff]
    %v191 = vld [vmem:[%s1 + $0xa0] sm:$0x1]
    %v192 = vlaneseq
    %v193 = vshrl.u32 %v192, 7
    %v194 = vsub.s32 0, %v193
    %v195 = vrot.slane %v191, %v194
    %v197 = vsel %vm108, %v182, 0
    %199 = vmatprep.subr.mxu0 0.0
    %200 = vmatpush1.msra.mxu0 0.0
    %201 = vmatprep.subr.mxu0 0.0
    %202 = vmatpush1.msra.mxu0 0.0
    %203 = vmatprep.subr.mxu0 0.0
    %204 = vmatpush1.msra.mxu0 0.0
    %205 = vmatprep.subr.mxu0 0.0
    %206 = vmatpush1.msra.mxu0 0.0
    %207 = vmatprep.subr.mxu0 0.0
    %208 = vmatpush1.msra.mxu0 0.0
    %209 = vmatprep.subr.mxu0 0.0
    %210 = vmatpush1.msra.mxu0 0.0
    %211 = vmatprep.subr.mxu0 0.0
    %212 = vmatpush1.msra.mxu0 0.0
    %213 = vmatprep.subr.mxu0 0.0
    %214 = vmatpush1.msra.mxu0 0.0
    %215 = vmatprep.subr.mxu0 0.0
    %216 = vmatpush1.msra.mxu0 %v190
    %217 = vmatprep.subr.mxu0 0.0
    %218 = vmatpush1.msra.mxu0 %v189
    %219 = vmatprep.subr.mxu0 0.0
    %220 = vmatpush1.msra.mxu0 %v188
    %221 = vmatprep.subr.mxu0 0.0
    %222 = vmatpush1.msra.mxu0 %v187
    %223 = vmatprep.subr.mxu0 0.0
    %224 = vmatpush1.msra.mxu0 %v186
    %225 = vmatprep.subr.mxu0 0.0
    %226 = vmatpush1.msra.mxu0 %v185
    %227 = vmatprep.subr.mxu0 0.0
    %228 = vmatpush1.msra.mxu0 %v184
    %229 = vmatprep.subr.mxu0 0.0
    %230 = vmatpush1.msra.mxu0 %v183
    %231 = vmatprep.subr.mxu0 0.0
    %232 = vmatpush2.msra.mxu0 0.0
    %233 = vmatprep.subr.mxu0 0.0
    %234 = vmatpush2.msra.mxu0 0.0
    %235 = vmatprep.subr.mxu0 0.0
    %236 = vmatpush2.msra.mxu0 0.0
    %237 = vmatprep.subr.mxu0 0.0
    %238 = vmatpush2.msra.mxu0 0.0
    %239 = vmatprep.subr.mxu0 0.0
    %240 = vmatpush2.msra.mxu0 0.0
    %241 = vmatprep.subr.mxu0 0.0
    %242 = vmatpush2.msra.mxu0 0.0
    %243 = vmatprep.subr.mxu0 0.0
    %244 = vmatpush2.msra.mxu0 0.0
    %245 = vmatprep.subr.mxu0 0.0
    %246 = vmatpush2.msra.mxu0 0.0
    %247 = vmatprep.subr.mxu0 0.0
    %248 = vmatpush2.msra.mxu0 0.0
    %249 = vmatprep.subr.mxu0 0.0
    %250 = vmatpush2.msra.mxu0 0.0
    %251 = vmatprep.subr.mxu0 0.0
    %252 = vmatpush2.msra.mxu0 0.0
    %253 = vmatprep.subr.mxu0 0.0
    %254 = vmatpush2.msra.mxu0 0.0
    %255 = vmatprep.subr.mxu0 0.0
    %256 = vmatpush2.msra.mxu0 0.0
    %257 = vmatprep.subr.mxu0 0.0
    %258 = vmatpush2.msra.mxu0 0.0
    %259 = vmatprep.subr.mxu0 0.0
    %260 = vmatpush2.msra.mxu0 0.0
    %261 = vmatprep.subr.mxu0 0.0
    %262 = vmatpush2.msra.mxu0 0.0
    %263 = vmatprep.mubr.f32.mxu0 0.0
    %264 = vmatmul.mubr.f32.gmra.mxu0 %v197
    %v265 = vpop.f32.mrf.mxu0
    %v266 = vadd.f32 %v195, %v265
    %v267 = vpop.f32.mrf.mxu0
    %268 = vdwg.mxu0
    %v269 = vmax.f32 %v266, 0.0
    %v270 = vld [vmem:[%s1 + $0xa8] sm:$0xff]
    %v271 = vld [vmem:[%s1 + $0xb0] sm:$0xff]
    %v272 = vld [vmem:[%s1 + $0xb8] sm:$0xff]
    %v273 = vld [vmem:[%s1 + $0xc0] sm:$0xff]
    %v274 = vld [vmem:[%s1 + $0xc8] sm:$0xff]
    %v275 = vld [vmem:[%s1 + $0xd0] sm:$0xff]
    %v276 = vld [vmem:[%s1 + $0xd8] sm:$0xff]
    %v277 = vld [vmem:[%s1 + $0xe0] sm:$0xff]
    %v278 = vld [vmem:[%s1 + $0xe8] sm:$0x1]
    %v279 = vlaneseq
    %v280 = vshrl.u32 %v279, 7
    %v281 = vsub.s32 0, %v280
    %v282 = vrot.slane %v278, %v281
    %v284 = vsel %vm108, %v269, 0
    %286 = vmatprep.subr.mxu0 0.0
    %287 = vmatpush1.msra.mxu0 0.0
    %288 = vmatprep.subr.mxu0 0.0
    %289 = vmatpush1.msra.mxu0 0.0
    %290 = vmatprep.subr.mxu0 0.0
    %291 = vmatpush1.msra.mxu0 0.0
    %292 = vmatprep.subr.mxu0 0.0
    %293 = vmatpush1.msra.mxu0 0.0
    %294 = vmatprep.subr.mxu0 0.0
    %295 = vmatpush1.msra.mxu0 0.0
    %296 = vmatprep.subr.mxu0 0.0
    %297 = vmatpush1.msra.mxu0 0.0
    %298 = vmatprep.subr.mxu0 0.0
    %299 = vmatpush1.msra.mxu0 0.0
    %300 = vmatprep.subr.mxu0 0.0
    %301 = vmatpush1.msra.mxu0 0.0
    %302 = vmatprep.subr.mxu0 0.0
    %303 = vmatpush1.msra.mxu0 %v277
    %304 = vmatprep.subr.mxu0 0.0
    %305 = vmatpush1.msra.mxu0 %v276
    %306 = vmatprep.subr.mxu0 0.0
    %307 = vmatpush1.msra.mxu0 %v275
    %308 = vmatprep.subr.mxu0 0.0
    %309 = vmatpush1.msra.mxu0 %v274
    %310 = vmatprep.subr.mxu0 0.0
    %311 = vmatpush1.msra.mxu0 %v273
    %312 = vmatprep.subr.mxu0 0.0
    %313 = vmatpush1.msra.mxu0 %v272
    %314 = vmatprep.subr.mxu0 0.0
    %315 = vmatpush1.msra.mxu0 %v271
    %316 = vmatprep.subr.mxu0 0.0
    %317 = vmatpush1.msra.mxu0 %v270
    %318 = vmatprep.subr.mxu0 0.0
    %319 = vmatpush2.msra.mxu0 0.0
    %320 = vmatprep.subr.mxu0 0.0
    %321 = vmatpush2.msra.mxu0 0.0
    %322 = vmatprep.subr.mxu0 0.0
    %323 = vmatpush2.msra.mxu0 0.0
    %324 = vmatprep.subr.mxu0 0.0
    %325 = vmatpush2.msra.mxu0 0.0
    %326 = vmatprep.subr.mxu0 0.0
    %327 = vmatpush2.msra.mxu0 0.0
    %328 = vmatprep.subr.mxu0 0.0
    %329 = vmatpush2.msra.mxu0 0.0
    %330 = vmatprep.subr.mxu0 0.0
    %331 = vmatpush2.msra.mxu0 0.0
    %332 = vmatprep.subr.mxu0 0.0
    %333 = vmatpush2.msra.mxu0 0.0
    %334 = vmatprep.subr.mxu0 0.0
    %335 = vmatpush2.msra.mxu0 0.0
    %336 = vmatprep.subr.mxu0 0.0
    %337 = vmatpush2.msra.mxu0 0.0
    %338 = vmatprep.subr.mxu0 0.0
    %339 = vmatpush2.msra.mxu0 0.0
    %340 = vmatprep.subr.mxu0 0.0
    %341 = vmatpush2.msra.mxu0 0.0
    %342 = vmatprep.subr.mxu0 0.0
    %343 = vmatpush2.msra.mxu0 0.0
    %344 = vmatprep.subr.mxu0 0.0
    %345 = vmatpush2.msra.mxu0 0.0
    %346 = vmatprep.subr.mxu0 0.0
    %347 = vmatpush2.msra.mxu0 0.0
    %348 = vmatprep.subr.mxu0 0.0
    %349 = vmatpush2.msra.mxu0 0.0
    %350 = vmatprep.mubr.f32.mxu0 0.0
    %351 = vmatmul.mubr.f32.gmra.mxu0 %v284
    %v352 = vpop.f32.mrf.mxu0
    %v353 = vadd.f32 %v282, %v352
    %v354 = vpop.f32.mrf.mxu0
    %355 = vdwg.mxu0
    %356 = vst.msk [vmem:[#allocation2] sm:$0xff] %vm108, %v353
    // Predicated region
    $region10: #{tpu_custom_call.1} parent=1 // pred_check
      _
    $region11: #{tpu_custom_call.1} parent=1 // pred_check_branch
      %358 = sbr.rel (0) target = $region13
    $region12: #{tpu_custom_call.1} parent=1 // pred_region
      %s360 = ssub.s32 128, 128
      %361 = vsyncadd [#allocation3], %s360
      %s363 = sshll.u32 [#allocation2], 4
      %s364 = int_to_ptr.vmem [resolvable:$true] %s363
      %366 = dma.vmem_to_hbm [thread:$0]  %s364, 128, %s2, [#allocation3]
    $region13: #{tpu_custom_call.1} parent=1 // pred_fallthru
      _
    // Predicated region
    $region14: #{tpu_custom_call.1} parent=1 // pred_check
      _
    $region15: #{tpu_custom_call.1} parent=1 // pred_check_branch
      %368 = sbr.rel (0) target = $region17
    $region16: #{tpu_custom_call.1} parent=1 // pred_region
      %369 = dma.done [#allocation3], 128
    $region17: #{tpu_custom_call.1} parent=1 // pred_fallthru
      _
    %370 = vsyncpa [#allocation3], 1

</llo_original>
